<compile_context>
chip_gen: v7x
topology: tpu7x:2x2x1
jax: 0.10.0
libtpu: 0.0.40
codegen_flags: <defaults>
</compile_context>

<pallas_src>
import functools
import math

import jax
import jax.numpy as jnp
from jax.experimental import pallas as pl
from jax.experimental.pallas import tpu as pltpu


# ----------------------------- Pallas kernel --------------------------------


def _layernorm_kernel(x_ref, a_ref, b_ref, o_ref, *, eps):
    # x_ref: (TR, D); a_ref/b_ref: (1, D); o_ref: (TR, D)
    x = x_ref[...].astype(jnp.float32)
    d = x.shape[-1]
    mean = jnp.mean(x, axis=-1, keepdims=True)
    xc = x - mean
    # torch.std => unbiased variance (ddof = 1).
    var = jnp.sum(xc * xc, axis=-1, keepdims=True) * (1.0 / (d - 1))
    std = jnp.sqrt(var)
    # Exact reciprocal (approx=False): bit-faithful to torch's divide and
    # still free for a memory-bound kernel.  (std + eps) ordering preserved.
    inv = pl.reciprocal(std + eps, approx=False)
    y = a_ref[...].astype(jnp.float32) * (xc * inv) + b_ref[...].astype(jnp.float32)
    o_ref[...] = y.astype(o_ref.dtype)


# ------------------------------ Host wrapper ---------------------------------


def _round_up8(n):
    return -(-n // 8) * 8


def _choose_row_tile(m, d, itemsize=4, target_bytes=4 << 20, max_rows=32768):
    """Rows per block: multiple of 8, ~4 MiB per block, >=2 grid steps if possible."""
    tr = target_bytes // max(1, d * itemsize)
    tr = max(8, min(max_rows, (tr // 8) * 8))
    if m >= 16:
        # Keep at least two grid steps so v7x's two TensorCores both get rows.
        tr = min(tr, max(8, _round_up8(-(-m // 2))))
    return tr


def layernorm_pallas(x, a2, b2, eps=1e-6, row_tile=None):
    """LayerNorm over the last dim of x (any leading shape), torch semantics."""
    orig_shape = x.shape
    d = orig_shape[-1]
    m = math.prod(orig_shape[:-1]) if len(orig_shape) > 1 else 1
    x2d = x.reshape(m, d)

    tr = row_tile if row_tile is not None else _choose_row_tile(m, d, x.dtype.itemsize)

    # Partial last block is handled by Pallas masking: OOB rows are read as
    # unspecified data but their writes are masked, and every row is
    # independent, so no padding / slicing passes over HBM are needed.
    grid = (pl.cdiv(m, tr),)

    out = pl.pallas_call(
        functools.partial(_layernorm_kernel, eps=eps),
        out_shape=jax.ShapeDtypeStruct((m, d), x.dtype),
        grid=grid,
        in_specs=[
            pl.BlockSpec((tr, d), lambda i: (i, 0)),
            pl.BlockSpec((1, d), lambda i: (0, 0)),   # gamma resident
            pl.BlockSpec((1, d), lambda i: (0, 0)),   # beta resident
        ],
        out_specs=pl.BlockSpec((tr, d), lambda i: (i, 0)),
        compiler_params=pltpu.CompilerParams(
            dimension_semantics=("parallel",),
            # Lift v5e's 16 MiB default scoped limit; stays well under v7x's
            # 64 MiB physical VMEM (2x in + 2x out blocks ~= 16 MiB here).
            vmem_limit_bytes=48 << 20,
        ),
    )(x2d, a2.reshape(1, d), b2.reshape(1, d))

    return out.reshape(orig_shape)


# --------------------------- Pure-JAX reference -------------------------------


def layernorm_ref(x, a2, b2, eps=1e-6):
    mean = x.mean(-1, keepdims=True)
    var = jnp.sum((x - mean) ** 2, -1, keepdims=True) / (x.shape[-1] - 1)
    std = jnp.sqrt(var)
    return a2 * (x - mean) / (std + eps) + b2


# ---------------------------------- main --------------------------------------


if __name__ == "__main__":
    key = jax.random.PRNGKey(0)
    kx, ka, kb, kx2 = jax.random.split(key, 4)

    # Primary case: lane-dense feature dim (128 multiple), 2-step parallel grid.
    B, S, D = 2, 256, 128
    x = jax.random.normal(kx, (B, S, D), jnp.float32)
    a2 = 1.0 + 0.1 * jax.random.normal(ka, (D,), jnp.float32)
    b2 = 0.1 * jax.random.normal(kb, (D,), jnp.float32)

    fwd = jax.jit(layernorm_pallas)
    out = jax.block_until_ready(fwd(x, a2, b2))
    ref = layernorm_ref(x, a2, b2)
    assert out.shape == x.shape
    err = float(jnp.abs(out - ref).max())
    assert jnp.allclose(out, ref, rtol=1e-4, atol=1e-4), err

    # Ragged case: rows not a multiple of the tile (partial masked last block)
    # and D not a multiple of 128 (block last dim == full array dim).  The
    # masked vst path here is a known, accepted cost for non-128-multiple D.
    B2, S2, D2 = 3, 7, 96
    x2 = jax.random.normal(kx2, (B2, S2, D2), jnp.float32)
    a22 = jnp.ones((D2,), jnp.float32)
    b22 = jnp.zeros((D2,), jnp.float32)
    out2 = jax.block_until_ready(jax.jit(layernorm_pallas)(x2, a22, b22))
    ref2 = layernorm_ref(x2, a22, b22)
    err2 = float(jnp.abs(out2 - ref2).max())
    assert jnp.allclose(out2, ref2, rtol=1e-4, atol=1e-4), err2

    print("KERNEL_OK")
</pallas_src>

<mosaic_0001>
module attributes {stable_mosaic.version = 11 : i64} {
  func.func @_layernorm_kernel(%arg0: i32, %arg1: memref<256x128xf32, #tpu.memory_space<vmem>>, %arg2: memref<1x128xf32, #tpu.memory_space<vmem>>, %arg3: memref<1x128xf32, #tpu.memory_space<vmem>>, %arg4: memref<256x128xf32, #tpu.memory_space<vmem>>) attributes {dimension_semantics = [#tpu.dimension_semantics<parallel>], iteration_bounds = array<i64: 2>, scalar_prefetch = 0 : i64, scratch_operands = 0 : i64, tpu.core_type = #tpu.core_type<tc>, window_params = [{transform_indices = @transform_0, window_bounds = array<i64: 256, 128>}, {pipeline_mode = #tpu.pipeline_mode<synchronous>, transform_indices = @transform_1, window_bounds = array<i64: 1, 128>}, {pipeline_mode = #tpu.pipeline_mode<synchronous>, transform_indices = @transform_2, window_bounds = array<i64: 1, 128>}, {transform_indices = @transform_3, window_bounds = array<i64: 256, 128>}]} {
    %c0 = arith.constant 0 : index
    %c0_0 = arith.constant 0 : index
    %0 = vector.load %arg1[%c0, %c0_0] : memref<256x128xf32, #tpu.memory_space<vmem>>, vector<256x128xf32>
    %cst = arith.constant dense<0.000000e+00> : vector<256xf32>
    %1 = vector.multi_reduction <add>, %0, %cst [1] : vector<256x128xf32> to vector<256xf32>
    %2 = vector.shape_cast %1 : vector<256xf32> to vector<256x1xf32>
    %cst_1 = arith.constant 1.280000e+02 : f32
    %3 = vector.broadcast %cst_1 : f32 to vector<256x1xf32>
    %4 = arith.divf %2, %3 : vector<256x1xf32>
    %5 = vector.broadcast %4 : vector<256x1xf32> to vector<256x128xf32>
    %6 = arith.subf %0, %5 : vector<256x128xf32>
    %7 = arith.mulf %6, %6 : vector<256x128xf32>
    %cst_2 = arith.constant dense<0.000000e+00> : vector<256xf32>
    %8 = vector.multi_reduction <add>, %7, %cst_2 [1] : vector<256x128xf32> to vector<256xf32>
    %9 = vector.shape_cast %8 : vector<256xf32> to vector<256x1xf32>
    %cst_3 = arith.constant 0.00787401571 : f32
    %10 = vector.broadcast %cst_3 : f32 to vector<256x1xf32>
    %11 = arith.mulf %9, %10 : vector<256x1xf32>
    %12 = math.sqrt %11 : vector<256x1xf32>
    %cst_4 = arith.constant 9.99999997E-7 : f32
    %13 = vector.broadcast %cst_4 : f32 to vector<256x1xf32>
    %14 = arith.addf %12, %13 : vector<256x1xf32>
    %15 = tpu.reciprocal %14 : vector<256x1xf32> -> vector<256x1xf32>
    %c0_5 = arith.constant 0 : index
    %c0_6 = arith.constant 0 : index
    %16 = vector.load %arg2[%c0_5, %c0_6] : memref<1x128xf32, #tpu.memory_space<vmem>>, vector<1x128xf32>
    %17 = vector.broadcast %15 : vector<256x1xf32> to vector<256x128xf32>
    %18 = arith.mulf %6, %17 : vector<256x128xf32>
    %19 = vector.broadcast %16 : vector<1x128xf32> to vector<256x128xf32>
    %20 = arith.mulf %19, %18 : vector<256x128xf32>
    %c0_7 = arith.constant 0 : index
    %c0_8 = arith.constant 0 : index
    %21 = vector.load %arg3[%c0_7, %c0_8] : memref<1x128xf32, #tpu.memory_space<vmem>>, vector<1x128xf32>
    %22 = vector.broadcast %21 : vector<1x128xf32> to vector<256x128xf32>
    %23 = arith.addf %20, %22 : vector<256x128xf32>
    %c0_9 = arith.constant 0 : index
    %c0_10 = arith.constant 0 : index
    %24 = vector.load %arg4[%c0_9, %c0_10] : memref<256x128xf32, #tpu.memory_space<vmem>>, vector<256x128xf32>
    tpu.vector_store %arg4[%c0_9, %c0_10], %23 {strides = array<i32>} : memref<256x128xf32, #tpu.memory_space<vmem>>, vector<256x128xf32>,
    return
  }
  func.func @transform_0(%arg0: i32) -> (i32, i32) {
    %c0_i32 = arith.constant 0 : i32
    %c0_i32_0 = arith.constant 0 : i32
    return %arg0, %c0_i32 : i32, i32
  }
  func.func @transform_1(%arg0: i32) -> (i32, i32) {
    %c0_i32 = arith.constant 0 : i32
    %c0_i32_0 = arith.constant 0 : i32
    %c0_i32_1 = arith.constant 0 : i32
    return %c0_i32, %c0_i32_0 : i32, i32
  }
  func.func @transform_2(%arg0: i32) -> (i32, i32) {
    %c0_i32 = arith.constant 0 : i32
    %c0_i32_0 = arith.constant 0 : i32
    %c0_i32_1 = arith.constant 0 : i32
    return %c0_i32, %c0_i32_0 : i32, i32
  }
  func.func @transform_3(%arg0: i32) -> (i32, i32) {
    %c0_i32 = arith.constant 0 : i32
    %c0_i32_0 = arith.constant 0 : i32
    return %arg0, %c0_i32 : i32, i32
  }
}

</mosaic_0001>

<llo_original>
// kernel: layernorm_pallas.1
$region0: #{layernorm_pallas.1}
  #allocation0 [shape = 'u32[]', space=smem, size = 0x4, offset = 0x4, fixed_abs, tag = 'smem constant byte address 0x4 - core index']
  #allocation1 [shape = 'u32[144,128]{1,0:T(1,128)}', space=vmem, size = 0x12000, scoped, tag = 'internal scratch']
  %s0 = inlined_call_operand.hbm [shape: f32[512,128], index: 0, kind: input, shape index: {}]
  %s1 = inlined_call_operand.vmem [shape: f32[1,128], index: 1, kind: input, shape index: {}]
  %s2 = inlined_call_operand.vmem [shape: f32[1,128], index: 2, kind: input, shape index: {}]
  %s3 = inlined_call_operand.hbm [shape: f32[512,128], index: 3, kind: output, shape index: {}]
  %s4 = sld [smem:[#allocation0]]
  $region49: #{layernorm_pallas.1} parent=0
    _
  %s6 = ssub.s32 1, %s4
  %s7 = scalar_select 0, %s6, %s4
  $region1: #{layernorm_pallas.1} parent=0
    #allocation2 [shape = 'u8[262144]{0}', space=vmem, size = 0x40000, scoped, tag = 'input window, operand 0']
    #allocation3 [shape = 's32[2]{0}', space=sflag, size = 0x8, scoped, tag = 'scoped memory for layernorm_pallas.1']
    #allocation4 [shape = 's32[2]{0}', space=sflag, size = 0x8, scoped, tag = 'scoped memory for layernorm_pallas.1']
    #allocation5 [shape = 'u8[262144]{0}', space=vmem, size = 0x40000, scoped, tag = 'output window, operand 0']
    %8 = vsyncpa [#allocation3], 0
    %s9 = scalar_lea.sflag [#allocation3], 1
    %10 = vsyncpa %s9, 0
    %11 = vsyncpa [#allocation4], 0
    %s12 = scalar_lea.sflag [#allocation4], 1
    %13 = vsyncpa %s12, 0
    loop: start=0, step=1, limit=4
    $region2: #{layernorm_pallas.1} parent=1 // loop_pre_header
      _
    $region3: #{layernorm_pallas.1} parent=1 // loop_header
      %s15 = sphi 0, %s19
      %p16 = scmp.ge.s32.totalorder %s15, 4
      %s25 = sphi 0, %s27
      %s28 = sphi 0, %s25
      %s29 = sphi 0, %s28
      %s45 = sphi 0, %s29
      %s49 = sphi 0, %s49
      %s51 = sphi 0, %s49
      %s52 = sphi 0, %s51
      %s66 = sphi 0, %s52
      %s70 = sphi 0, %s70
      %s72 = sphi 0, %s70
      %s73 = sphi 0, %s72
      %s87 = sphi 0, %s73
      %s93 = sphi 0, %s95
      %s96 = sphi 0, %s93
      %s97 = sphi 0, %s96
      %s113 = sphi 0, %s97
    $region4: #{layernorm_pallas.1} parent=1 // loop_header_branch
      %18 = sbr.rel (%p16) target = $region8
    $region5: #{layernorm_pallas.1} parent=1 // loop_body
      %s20 = ssub.s32 %s15, 1
      %s21 = ssub.s32 %s15, 2
      %s22 = sadd.s32 %s15, 1
      %s23 = ssub.s32 %s15, %s22
      %p24 = scmp.eq.s32.totalorder %s23, 0
      %s26 = sadd.s32 %s25, 1
      %s27 = scalar_select %p24, %s25, %s26
      %p30 = pneg %p24
      %p31 = scmp.eq.s32.totalorder %s15, 1
      %p32 = por %p30, %p31
      %p33 = scmp.ne.s32.totalorder %s25, %s28
      %p34 = scmp.eq.s32.totalorder %s15, 0
      %p35 = por %p33, %p34
      %p36 = scmp.ne.s32.totalorder %s25, %s28
      %p37 = scmp.eq.s32.totalorder %s20, 1
      %p38 = por %p36, %p37
      %p39 = scmp.ne.s32.totalorder %s28, %s29
      %p40 = scmp.eq.s32.totalorder %s20, 0
      %p41 = por %p39, %p40
      %p42 = scmp.ne.s32.totalorder %s28, %s29
      %p43 = scmp.eq.s32.totalorder %s21, 1
      %p44 = por %p42, %p43
      %p46 = scmp.ne.s32.totalorder %s29, %s45
      %p47 = scmp.eq.s32.totalorder %s21, 0
      %p48 = por %p46, %p47
      %s50 = sadd.s32 %s49, 1
      %p53 = scmp.eq.s32.totalorder %s15, 1
      %p54 = scmp.ne.s32.totalorder %s49, %s51
      %p55 = scmp.eq.s32.totalorder %s15, 0
      %p56 = por %p54, %p55
      %p57 = scmp.ne.s32.totalorder %s49, %s51
      %p58 = scmp.eq.s32.totalorder %s20, 1
      %p59 = por %p57, %p58
      %p60 = scmp.ne.s32.totalorder %s51, %s52
      %p61 = scmp.eq.s32.totalorder %s20, 0
      %p62 = por %p60, %p61
      %p63 = scmp.ne.s32.totalorder %s51, %s52
      %p64 = scmp.eq.s32.totalorder %s21, 1
      %p65 = por %p63, %p64
      %p67 = scmp.ne.s32.totalorder %s52, %s66
      %p68 = scmp.eq.s32.totalorder %s21, 0
      %p69 = por %p67, %p68
      %s71 = sadd.s32 %s70, 1
      %p74 = scmp.eq.s32.totalorder %s15, 1
      %p75 = scmp.ne.s32.totalorder %s70, %s72
      %p76 = scmp.eq.s32.totalorder %s15, 0
      %p77 = por %p75, %p76
      %p78 = scmp.ne.s32.totalorder %s70, %s72
      %p79 = scmp.eq.s32.totalorder %s20, 1
      %p80 = por %p78, %p79
      %p81 = scmp.ne.s32.totalorder %s72, %s73
      %p82 = scmp.eq.s32.totalorder %s20, 0
      %p83 = por %p81, %p82
      %p84 = scmp.ne.s32.totalorder %s72, %s73
      %p85 = scmp.eq.s32.totalorder %s21, 1
      %p86 = por %p84, %p85
      %p88 = scmp.ne.s32.totalorder %s73, %s87
      %p89 = scmp.eq.s32.totalorder %s21, 0
      %p90 = por %p88, %p89
      %s91 = ssub.s32 %s15, %s22
      %p92 = scmp.eq.s32.totalorder %s91, 0
      %s94 = sadd.s32 %s93, 1
      %s95 = scalar_select %p92, %s93, %s94
      %p98 = pneg %p92
      %p99 = scmp.eq.s32.totalorder %s15, 1
      %p100 = por %p98, %p99
      %p101 = scmp.ne.s32.totalorder %s93, %s96
      %p102 = scmp.eq.s32.totalorder %s15, 0
      %p103 = por %p101, %p102
      %p104 = scmp.ne.s32.totalorder %s93, %s96
      %p105 = scmp.eq.s32.totalorder %s20, 1
      %p106 = por %p104, %p105
      %p107 = scmp.ne.s32.totalorder %s96, %s97
      %p108 = scmp.eq.s32.totalorder %s20, 0
      %p109 = por %p107, %p108
      %p110 = scmp.ne.s32.totalorder %s96, %s97
      %p111 = scmp.eq.s32.totalorder %s21, 1
      %p112 = por %p110, %p111
      %p114 = scmp.ne.s32.totalorder %s97, %s113
      %p115 = scmp.eq.s32.totalorder %s21, 0
      %p116 = por %p114, %p115
      %p117 = scmp.le.s32.totalorder 1, %s15
      %p118 = scmp.lt.s32.totalorder %s15, 3
      %p119 = pnand %p117, %p118
      %p120 = pneg %p119
      // Predicated region
      $region9: #{layernorm_pallas.1} parent=5 // pred_check
        _
      $region10: #{layernorm_pallas.1} parent=5 // pred_check_branch
        %122 = sbr.rel (%p119) target = $region12
      $region11: #{layernorm_pallas.1} parent=5 // pred_region
        %s123 = ssub.s32 %s15, 1
        // Predicated region
        $region13: #{layernorm_pallas.1} parent=11 // pred_check
          %p124 = pneg %p62
        $region14: #{layernorm_pallas.1} parent=11 // pred_check_branch
          %126 = sbr.rel (%p124) target = $region16
        $region15: #{layernorm_pallas.1} parent=11 // pred_region
          _
        $region16: #{layernorm_pallas.1} parent=11 // pred_fallthru
          _
        // Predicated region
        $region17: #{layernorm_pallas.1} parent=11 // pred_check
          %p127 = pneg %p83
        $region18: #{layernorm_pallas.1} parent=11 // pred_check_branch
          %129 = sbr.rel (%p127) target = $region20
        $region19: #{layernorm_pallas.1} parent=11 // pred_region
          _
        $region20: #{layernorm_pallas.1} parent=11 // pred_fallthru
          _
      $region12: #{layernorm_pallas.1} parent=5 // pred_fallthru
        _
      %p130 = scmp.lt.s32.totalorder %s15, 2
      // Predicated region
      $region21: #{layernorm_pallas.1} parent=5 // pred_check
        %p131 = pneg %p130
      $region22: #{layernorm_pallas.1} parent=5 // pred_check_branch
        %133 = sbr.rel (%p131) target = $region24
      $region23: #{layernorm_pallas.1} parent=5 // pred_region
        // Predicated region
        $region25: #{layernorm_pallas.1} parent=23 // pred_check
          %p134 = pneg %p35
        $region26: #{layernorm_pallas.1} parent=23 // pred_check_branch
          %136 = sbr.rel (%p134) target = $region28
        $region27: #{layernorm_pallas.1} parent=23 // pred_region
          %s137 = sand.u32 %s25, 1
          %s138 = scalar_lea.sflag [#allocation3], %s137
          %s139 = sand.u32 %s25, 1
          %s140 = smul.addr %s139, 256
          %s141 = scalar_lea.vmem [#allocation2], %s140
          %s142 = smul.u32 32, %s15
          %s144 = ssub.s32 4096, 4096
          %145 = vsyncadd %s138, %s144
          %s146 = smul.addr %s142, 128
          %s147 = scalar_lea.hbm %s0, %s146
          %s148 = sshll.u32 %s141, 4
          %s149 = int_to_ptr.vmem [resolvable:$true] %s148
          %154 = dma.hbm_to_vmem [thread:$0]  %s147, 4096, %s149, %s138, 128, 128, 8
        $region28: #{layernorm_pallas.1} parent=23 // pred_fallthru
          _
      $region24: #{layernorm_pallas.1} parent=5 // pred_fallthru
        _
      %p155 = scmp.le.s32.totalorder 1, %s15
      %p156 = scmp.lt.s32.totalorder %s15, 3
      %p157 = pnand %p155, %p156
      %p158 = pneg %p157
      // Predicated region
      $region29: #{layernorm_pallas.1} parent=5 // pred_check
        _
      $region30: #{layernorm_pallas.1} parent=5 // pred_check_branch
        %160 = sbr.rel (%p157) target = $region32
      $region31: #{layernorm_pallas.1} parent=5 // pred_region
        %s161 = ssub.s32 %s15, 1
        %s162 = sand.u32 %s28, 1
        %s163 = scalar_lea.sflag [#allocation3], %s162
        %s164 = sand.u32 %s28, 1
        %s165 = smul.addr %s164, 256
        %s166 = scalar_lea.vmem [#allocation2], %s165
        // Predicated region
        $region33: #{layernorm_pallas.1} parent=31 // pred_check
          %p167 = pneg %p41
        $region34: #{layernorm_pallas.1} parent=31 // pred_check_branch
          %169 = sbr.rel (%p167) target = $region36
        $region35: #{layernorm_pallas.1} parent=31 // pred_region
          %170 = dma.done %s163, 4096
        $region36: #{layernorm_pallas.1} parent=31 // pred_fallthru
          _
        %s171 = sand.u32 %s28, 1
        %s172 = scalar_lea.sflag [#allocation3], %s171
        %s173 = sand.u32 %s28, 1
        %s174 = smul.addr %s173, 256
        %s175 = scalar_lea.vmem [#allocation2], %s174
        %p176 = pneg %p41
        %p177 = pneg %p38
        %p178 = pneg %p62
        %p179 = pneg %p59
        %p180 = pneg %p83
        %p181 = pneg %p80
        %p182 = pneg %p109
        %p183 = pneg %p106
        %s184 = sand.u32 %s96, 1
        %s185 = scalar_lea.sflag [#allocation4], %s184
        %s186 = sand.u32 %s96, 1
        %s187 = smul.addr %s186, 256
        %s188 = scalar_lea.vmem [#allocation5], %s187
        %s189 = smul.u32 32, %s20
        %s190 = smul.u32 32, %s20
        %v191 = vld [vmem:[%s166] sm:$0xff]
        %v192 = vld [vmem:[%s166 + $0x8] sm:$0xff]
        %v193 = vld [vmem:[%s166 + $0x10] sm:$0xff]
        %v194 = vld [vmem:[%s166 + $0x18] sm:$0xff]
        %v195 = vld [vmem:[%s166 + $0x20] sm:$0xff]
        %v196 = vld [vmem:[%s166 + $0x28] sm:$0xff]
        %v197 = vld [vmem:[%s166 + $0x30] sm:$0xff]
        %v198 = vld [vmem:[%s166 + $0x38] sm:$0xff]
        %v199 = vld [vmem:[%s166 + $0x40] sm:$0xff]
        %v200 = vld [vmem:[%s166 + $0x48] sm:$0xff]
        %v201 = vld [vmem:[%s166 + $0x50] sm:$0xff]
        %v202 = vld [vmem:[%s166 + $0x58] sm:$0xff]
        %v203 = vld [vmem:[%s166 + $0x60] sm:$0xff]
        %v204 = vld [vmem:[%s166 + $0x68] sm:$0xff]
        %v205 = vld [vmem:[%s166 + $0x70] sm:$0xff]
        %v206 = vld [vmem:[%s166 + $0x78] sm:$0xff]
        %v207 = vld [vmem:[%s166 + $0x80] sm:$0xff]
        %v208 = vld [vmem:[%s166 + $0x88] sm:$0xff]
        %v209 = vld [vmem:[%s166 + $0x90] sm:$0xff]
        %v210 = vld [vmem:[%s166 + $0x98] sm:$0xff]
        %v211 = vld [vmem:[%s166 + $0xa0] sm:$0xff]
        %v212 = vld [vmem:[%s166 + $0xa8] sm:$0xff]
        %v213 = vld [vmem:[%s166 + $0xb0] sm:$0xff]
        %v214 = vld [vmem:[%s166 + $0xb8] sm:$0xff]
        %v215 = vld [vmem:[%s166 + $0xc0] sm:$0xff]
        %v216 = vld [vmem:[%s166 + $0xc8] sm:$0xff]
        %v217 = vld [vmem:[%s166 + $0xd0] sm:$0xff]
        %v218 = vld [vmem:[%s166 + $0xd8] sm:$0xff]
        %v219 = vld [vmem:[%s166 + $0xe0] sm:$0xff]
        %v220 = vld [vmem:[%s166 + $0xe8] sm:$0xff]
        %v221 = vld [vmem:[%s166 + $0xf0] sm:$0xff]
        %v222 = vld [vmem:[%s166 + $0xf8] sm:$0xff]
        %223 = vadd.xlane.f32.xlu0 %v191
        %v224 = vpop.xlane.xlu0 %223
        %225 = vadd.xlane.f32.xlu0 %v192
        %v226 = vpop.xlane.xlu0 %225
        %227 = vadd.xlane.f32.xlu0 %v193
        %v228 = vpop.xlane.xlu0 %227
        %229 = vadd.xlane.f32.xlu0 %v194
        %v230 = vpop.xlane.xlu0 %229
        %231 = vadd.xlane.f32.xlu0 %v195
        %v232 = vpop.xlane.xlu0 %231
        %233 = vadd.xlane.f32.xlu0 %v196
        %v234 = vpop.xlane.xlu0 %233
        %235 = vadd.xlane.f32.xlu0 %v197
        %v236 = vpop.xlane.xlu0 %235
        %237 = vadd.xlane.f32.xlu0 %v198
        %v238 = vpop.xlane.xlu0 %237
        %239 = vadd.xlane.f32.xlu0 %v199
        %v240 = vpop.xlane.xlu0 %239
        %241 = vadd.xlane.f32.xlu0 %v200
        %v242 = vpop.xlane.xlu0 %241
        %243 = vadd.xlane.f32.xlu0 %v201
        %v244 = vpop.xlane.xlu0 %243
        %245 = vadd.xlane.f32.xlu0 %v202
        %v246 = vpop.xlane.xlu0 %245
        %247 = vadd.xlane.f32.xlu0 %v203
        %v248 = vpop.xlane.xlu0 %247
        %249 = vadd.xlane.f32.xlu0 %v204
        %v250 = vpop.xlane.xlu0 %249
        %251 = vadd.xlane.f32.xlu0 %v205
        %v252 = vpop.xlane.xlu0 %251
        %253 = vadd.xlane.f32.xlu0 %v206
        %v254 = vpop.xlane.xlu0 %253
        %255 = vadd.xlane.f32.xlu0 %v207
        %v256 = vpop.xlane.xlu0 %255
        %257 = vadd.xlane.f32.xlu0 %v208
        %v258 = vpop.xlane.xlu0 %257
        %259 = vadd.xlane.f32.xlu0 %v209
        %v260 = vpop.xlane.xlu0 %259
        %261 = vadd.xlane.f32.xlu0 %v210
        %v262 = vpop.xlane.xlu0 %261
        %263 = vadd.xlane.f32.xlu0 %v211
        %v264 = vpop.xlane.xlu0 %263
        %265 = vadd.xlane.f32.xlu0 %v212
        %v266 = vpop.xlane.xlu0 %265
        %267 = vadd.xlane.f32.xlu0 %v213
        %v268 = vpop.xlane.xlu0 %267
        %269 = vadd.xlane.f32.xlu0 %v214
        %v270 = vpop.xlane.xlu0 %269
        %271 = vadd.xlane.f32.xlu0 %v215
        %v272 = vpop.xlane.xlu0 %271
        %273 = vadd.xlane.f32.xlu0 %v216
        %v274 = vpop.xlane.xlu0 %273
        %275 = vadd.xlane.f32.xlu0 %v217
        %v276 = vpop.xlane.xlu0 %275
        %277 = vadd.xlane.f32.xlu0 %v218
        %v278 = vpop.xlane.xlu0 %277
        %279 = vadd.xlane.f32.xlu0 %v219
        %v280 = vpop.xlane.xlu0 %279
        %281 = vadd.xlane.f32.xlu0 %v220
        %v282 = vpop.xlane.xlu0 %281
        %283 = vadd.xlane.f32.xlu0 %v221
        %v284 = vpop.xlane.xlu0 %283
        %285 = vadd.xlane.f32.xlu0 %v222
        %v286 = vpop.xlane.xlu0 %285
        %v287 = vrcp.pop 128.0
        %v288 = vmul.f32 %v224, %v287
        %v289 = vmul.f32 %v226, %v287
        %v290 = vmul.f32 %v228, %v287
        %v291 = vmul.f32 %v230, %v287
        %v292 = vmul.f32 %v232, %v287
        %v293 = vmul.f32 %v234, %v287
        %v294 = vmul.f32 %v236, %v287
        %v295 = vmul.f32 %v238, %v287
        %v296 = vmul.f32 %v240, %v287
        %v297 = vmul.f32 %v242, %v287
        %v298 = vmul.f32 %v244, %v287
        %v299 = vmul.f32 %v246, %v287
        %v300 = vmul.f32 %v248, %v287
        %v301 = vmul.f32 %v250, %v287
        %v302 = vmul.f32 %v252, %v287
        %v303 = vmul.f32 %v254, %v287
        %v304 = vmul.f32 %v256, %v287
        %v305 = vmul.f32 %v258, %v287
        %v306 = vmul.f32 %v260, %v287
        %v307 = vmul.f32 %v262, %v287
        %v308 = vmul.f32 %v264, %v287
        %v309 = vmul.f32 %v266, %v287
        %v310 = vmul.f32 %v268, %v287
        %v311 = vmul.f32 %v270, %v287
        %v312 = vmul.f32 %v272, %v287
        %v313 = vmul.f32 %v274, %v287
        %v314 = vmul.f32 %v276, %v287
        %v315 = vmul.f32 %v278, %v287
        %v316 = vmul.f32 %v280, %v287
        %v317 = vmul.f32 %v282, %v287
        %v318 = vmul.f32 %v284, %v287
        %v319 = vmul.f32 %v286, %v287
        %v320 = vsub.f32 %v191, %v288
        %v321 = vsub.f32 %v192, %v289
        %v322 = vsub.f32 %v193, %v290
        %v323 = vsub.f32 %v194, %v291
        %v324 = vsub.f32 %v195, %v292
        %v325 = vsub.f32 %v196, %v293
        %v326 = vsub.f32 %v197, %v294
        %v327 = vsub.f32 %v198, %v295
        %v328 = vsub.f32 %v199, %v296
        %v329 = vsub.f32 %v200, %v297
        %v330 = vsub.f32 %v201, %v298
        %v331 = vsub.f32 %v202, %v299
        %v332 = vsub.f32 %v203, %v300
        %v333 = vsub.f32 %v204, %v301
        %v334 = vsub.f32 %v205, %v302
        %v335 = vsub.f32 %v206, %v303
        %v336 = vsub.f32 %v207, %v304
        %v337 = vsub.f32 %v208, %v305
        %v338 = vsub.f32 %v209, %v306
        %v339 = vsub.f32 %v210, %v307
        %v340 = vsub.f32 %v211, %v308
        %v341 = vsub.f32 %v212, %v309
        %v342 = vsub.f32 %v213, %v310
        %v343 = vsub.f32 %v214, %v311
        %v344 = vsub.f32 %v215, %v312
        %v345 = vsub.f32 %v216, %v313
        %v346 = vsub.f32 %v217, %v314
        %v347 = vsub.f32 %v218, %v315
        %v348 = vsub.f32 %v219, %v316
        %v349 = vsub.f32 %v220, %v317
        %v350 = vsub.f32 %v221, %v318
        %v351 = vsub.f32 %v222, %v319
        %v352 = vmul.f32 %v320, %v320
        %v353 = vmul.f32 %v321, %v321
        %v354 = vmul.f32 %v322, %v322
        %v355 = vmul.f32 %v323, %v323
        %v356 = vmul.f32 %v324, %v324
        %v357 = vmul.f32 %v325, %v325
        %v358 = vmul.f32 %v326, %v326
        %v359 = vmul.f32 %v327, %v327
        %v360 = vmul.f32 %v328, %v328
        %v361 = vmul.f32 %v329, %v329
        %v362 = vmul.f32 %v330, %v330
        %v363 = vmul.f32 %v331, %v331
        %v364 = vmul.f32 %v332, %v332
        %v365 = vmul.f32 %v333, %v333
        %v366 = vmul.f32 %v334, %v334
        %v367 = vmul.f32 %v335, %v335
        %v368 = vmul.f32 %v336, %v336
        %v369 = vmul.f32 %v337, %v337
        %v370 = vmul.f32 %v338, %v338
        %v371 = vmul.f32 %v339, %v339
        %v372 = vmul.f32 %v340, %v340
        %v373 = vmul.f32 %v341, %v341
        %v374 = vmul.f32 %v342, %v342
        %v375 = vmul.f32 %v343, %v343
        %v376 = vmul.f32 %v344, %v344
        %v377 = vmul.f32 %v345, %v345
        %v378 = vmul.f32 %v346, %v346
        %v379 = vmul.f32 %v347, %v347
        %v380 = vmul.f32 %v348, %v348
        %v381 = vmul.f32 %v349, %v349
        %v382 = vmul.f32 %v350, %v350
        %v383 = vmul.f32 %v351, %v351
        %384 = vadd.xlane.f32.xlu0 %v352
        %v385 = vpop.xlane.xlu0 %384
        %386 = vadd.xlane.f32.xlu0 %v353
        %v387 = vpop.xlane.xlu0 %386
        %388 = vadd.xlane.f32.xlu0 %v354
        %v389 = vpop.xlane.xlu0 %388
        %390 = vadd.xlane.f32.xlu0 %v355
        %v391 = vpop.xlane.xlu0 %390
        %392 = vadd.xlane.f32.xlu0 %v356
        %v393 = vpop.xlane.xlu0 %392
        %394 = vadd.xlane.f32.xlu0 %v357
        %v395 = vpop.xlane.xlu0 %394
        %396 = vadd.xlane.f32.xlu0 %v358
        %v397 = vpop.xlane.xlu0 %396
        %398 = vadd.xlane.f32.xlu0 %v359
        %v399 = vpop.xlane.xlu0 %398
        %400 = vadd.xlane.f32.xlu0 %v360
        %v401 = vpop.xlane.xlu0 %400
        %402 = vadd.xlane.f32.xlu0 %v361
        %v403 = vpop.xlane.xlu0 %402
        %404 = vadd.xlane.f32.xlu0 %v362
        %v405 = vpop.xlane.xlu0 %404
        %406 = vadd.xlane.f32.xlu0 %v363
        %v407 = vpop.xlane.xlu0 %406
        %408 = vadd.xlane.f32.xlu0 %v364
        %v409 = vpop.xlane.xlu0 %408
        %410 = vadd.xlane.f32.xlu0 %v365
        %v411 = vpop.xlane.xlu0 %410
        %412 = vadd.xlane.f32.xlu0 %v366
        %v413 = vpop.xlane.xlu0 %412
        %414 = vadd.xlane.f32.xlu0 %v367
        %v415 = vpop.xlane.xlu0 %414
        %416 = vadd.xlane.f32.xlu0 %v368
        %v417 = vpop.xlane.xlu0 %416
        %418 = vadd.xlane.f32.xlu0 %v369
        %v419 = vpop.xlane.xlu0 %418
        %420 = vadd.xlane.f32.xlu0 %v370
        %v421 = vpop.xlane.xlu0 %420
        %422 = vadd.xlane.f32.xlu0 %v371
        %v423 = vpop.xlane.xlu0 %422
        %424 = vadd.xlane.f32.xlu0 %v372
        %v425 = vpop.xlane.xlu0 %424
        %426 = vadd.xlane.f32.xlu0 %v373
        %v427 = vpop.xlane.xlu0 %426
        %428 = vadd.xlane.f32.xlu0 %v374
        %v429 = vpop.xlane.xlu0 %428
        %430 = vadd.xlane.f32.xlu0 %v375
        %v431 = vpop.xlane.xlu0 %430
        %432 = vadd.xlane.f32.xlu0 %v376
        %v433 = vpop.xlane.xlu0 %432
        %434 = vadd.xlane.f32.xlu0 %v377
        %v435 = vpop.xlane.xlu0 %434
        %436 = vadd.xlane.f32.xlu0 %v378
        %v437 = vpop.xlane.xlu0 %436
        %438 = vadd.xlane.f32.xlu0 %v379
        %v439 = vpop.xlane.xlu0 %438
        %440 = vadd.xlane.f32.xlu0 %v380
        %v441 = vpop.xlane.xlu0 %440
        %442 = vadd.xlane.f32.xlu0 %v381
        %v443 = vpop.xlane.xlu0 %442
        %444 = vadd.xlane.f32.xlu0 %v382
        %v445 = vpop.xlane.xlu0 %444
        %446 = vadd.xlane.f32.xlu0 %v383
        %v447 = vpop.xlane.xlu0 %446
        %v448 = vmul.f32 %v385, 0.007874016
        %v449 = vmul.f32 %v387, 0.007874016
        %v450 = vmul.f32 %v389, 0.007874016
        %v451 = vmul.f32 %v391, 0.007874016
        %v452 = vmul.f32 %v393, 0.007874016
        %v453 = vmul.f32 %v395, 0.007874016
        %v454 = vmul.f32 %v397, 0.007874016
        %v455 = vmul.f32 %v399, 0.007874016
        %v456 = vmul.f32 %v401, 0.007874016
        %v457 = vmul.f32 %v403, 0.007874016
        %v458 = vmul.f32 %v405, 0.007874016
        %v459 = vmul.f32 %v407, 0.007874016
        %v460 = vmul.f32 %v409, 0.007874016
        %v461 = vmul.f32 %v411, 0.007874016
        %v462 = vmul.f32 %v413, 0.007874016
        %v463 = vmul.f32 %v415, 0.007874016
        %v464 = vmul.f32 %v417, 0.007874016
        %v465 = vmul.f32 %v419, 0.007874016
        %v466 = vmul.f32 %v421, 0.007874016
        %v467 = vmul.f32 %v423, 0.007874016
        %v468 = vmul.f32 %v425, 0.007874016
        %v469 = vmul.f32 %v427, 0.007874016
        %v470 = vmul.f32 %v429, 0.007874016
        %v471 = vmul.f32 %v431, 0.007874016
        %v472 = vmul.f32 %v433, 0.007874016
        %v473 = vmul.f32 %v435, 0.007874016
        %v474 = vmul.f32 %v437, 0.007874016
        %v475 = vmul.f32 %v439, 0.007874016
        %v476 = vmul.f32 %v441, 0.007874016
        %v477 = vmul.f32 %v443, 0.007874016
        %v478 = vmul.f32 %v445, 0.007874016
        %v479 = vmul.f32 %v447, 0.007874016
        %v480 = vrsqrt.pop %v448
        %v481 = vmul.f32 %v448, %v480
        %vm482 = vcmp.eq.f32.partialorder %v448, inf
        %v483 = vsel %vm482, %v448, %v481
        %vm484 = vcmp.eq.f32.partialorder %v448, 0.0
        %v485 = vand.u32 %v448, 2147483648
        %v486 = vsel %vm484, %v485, %v483
        %v487 = vrsqrt.pop %v449
        %v488 = vmul.f32 %v449, %v487
        %vm489 = vcmp.eq.f32.partialorder %v449, inf
        %v490 = vsel %vm489, %v449, %v488
        %vm491 = vcmp.eq.f32.partialorder %v449, 0.0
        %v492 = vand.u32 %v449, 2147483648
        %v493 = vsel %vm491, %v492, %v490
        %v494 = vrsqrt.pop %v450
        %v495 = vmul.f32 %v450, %v494
        %vm496 = vcmp.eq.f32.partialorder %v450, inf
        %v497 = vsel %vm496, %v450, %v495
        %vm498 = vcmp.eq.f32.partialorder %v450, 0.0
        %v499 = vand.u32 %v450, 2147483648
        %v500 = vsel %vm498, %v499, %v497
        %v501 = vrsqrt.pop %v451
        %v502 = vmul.f32 %v451, %v501
        %vm503 = vcmp.eq.f32.partialorder %v451, inf
        %v504 = vsel %vm503, %v451, %v502
        %vm505 = vcmp.eq.f32.partialorder %v451, 0.0
        %v506 = vand.u32 %v451, 2147483648
        %v507 = vsel %vm505, %v506, %v504
        %v508 = vrsqrt.pop %v452
        %v509 = vmul.f32 %v452, %v508
        %vm510 = vcmp.eq.f32.partialorder %v452, inf
        %v511 = vsel %vm510, %v452, %v509
        %vm512 = vcmp.eq.f32.partialorder %v452, 0.0
        %v513 = vand.u32 %v452, 2147483648
        %v514 = vsel %vm512, %v513, %v511
        %v515 = vrsqrt.pop %v453
        %v516 = vmul.f32 %v453, %v515
        %vm517 = vcmp.eq.f32.partialorder %v453, inf
        %v518 = vsel %vm517, %v453, %v516
        %vm519 = vcmp.eq.f32.partialorder %v453, 0.0
        %v520 = vand.u32 %v453, 2147483648
        %v521 = vsel %vm519, %v520, %v518
        %v522 = vrsqrt.pop %v454
        %v523 = vmul.f32 %v454, %v522
        %vm524 = vcmp.eq.f32.partialorder %v454, inf
        %v525 = vsel %vm524, %v454, %v523
        %vm526 = vcmp.eq.f32.partialorder %v454, 0.0
        %v527 = vand.u32 %v454, 2147483648
        %v528 = vsel %vm526, %v527, %v525
        %v529 = vrsqrt.pop %v455
        %v530 = vmul.f32 %v455, %v529
        %vm531 = vcmp.eq.f32.partialorder %v455, inf
        %v532 = vsel %vm531, %v455, %v530
        %vm533 = vcmp.eq.f32.partialorder %v455, 0.0
        %v534 = vand.u32 %v455, 2147483648
        %v535 = vsel %vm533, %v534, %v532
        %v536 = vrsqrt.pop %v456
        %v537 = vmul.f32 %v456, %v536
        %vm538 = vcmp.eq.f32.partialorder %v456, inf
        %v539 = vsel %vm538, %v456, %v537
        %vm540 = vcmp.eq.f32.partialorder %v456, 0.0
        %v541 = vand.u32 %v456, 2147483648
        %v542 = vsel %vm540, %v541, %v539
        %v543 = vrsqrt.pop %v457
        %v544 = vmul.f32 %v457, %v543
        %vm545 = vcmp.eq.f32.partialorder %v457, inf
        %v546 = vsel %vm545, %v457, %v544
        %vm547 = vcmp.eq.f32.partialorder %v457, 0.0
        %v548 = vand.u32 %v457, 2147483648
        %v549 = vsel %vm547, %v548, %v546
        %v550 = vrsqrt.pop %v458
        %v551 = vmul.f32 %v458, %v550
        %vm552 = vcmp.eq.f32.partialorder %v458, inf
        %v553 = vsel %vm552, %v458, %v551
        %vm554 = vcmp.eq.f32.partialorder %v458, 0.0
        %v555 = vand.u32 %v458, 2147483648
        %v556 = vsel %vm554, %v555, %v553
        %v557 = vrsqrt.pop %v459
        %v558 = vmul.f32 %v459, %v557
        %vm559 = vcmp.eq.f32.partialorder %v459, inf
        %v560 = vsel %vm559, %v459, %v558
        %vm561 = vcmp.eq.f32.partialorder %v459, 0.0
        %v562 = vand.u32 %v459, 2147483648
        %v563 = vsel %vm561, %v562, %v560
        %v564 = vrsqrt.pop %v460
        %v565 = vmul.f32 %v460, %v564
        %vm566 = vcmp.eq.f32.partialorder %v460, inf
        %v567 = vsel %vm566, %v460, %v565
        %vm568 = vcmp.eq.f32.partialorder %v460, 0.0
        %v569 = vand.u32 %v460, 2147483648
        %v570 = vsel %vm568, %v569, %v567
        %v571 = vrsqrt.pop %v461
        %v572 = vmul.f32 %v461, %v571
        %vm573 = vcmp.eq.f32.partialorder %v461, inf
        %v574 = vsel %vm573, %v461, %v572
        %vm575 = vcmp.eq.f32.partialorder %v461, 0.0
        %v576 = vand.u32 %v461, 2147483648
        %v577 = vsel %vm575, %v576, %v574
        %v578 = vrsqrt.pop %v462
        %v579 = vmul.f32 %v462, %v578
        %vm580 = vcmp.eq.f32.partialorder %v462, inf
        %v581 = vsel %vm580, %v462, %v579
        %vm582 = vcmp.eq.f32.partialorder %v462, 0.0
        %v583 = vand.u32 %v462, 2147483648
        %v584 = vsel %vm582, %v583, %v581
        %v585 = vrsqrt.pop %v463
        %v586 = vmul.f32 %v463, %v585
        %vm587 = vcmp.eq.f32.partialorder %v463, inf
        %v588 = vsel %vm587, %v463, %v586
        %vm589 = vcmp.eq.f32.partialorder %v463, 0.0
        %v590 = vand.u32 %v463, 2147483648
        %v591 = vsel %vm589, %v590, %v588
        %v592 = vrsqrt.pop %v464
        %v593 = vmul.f32 %v464, %v592
        %vm594 = vcmp.eq.f32.partialorder %v464, inf
        %v595 = vsel %vm594, %v464, %v593
        %vm596 = vcmp.eq.f32.partialorder %v464, 0.0
        %v597 = vand.u32 %v464, 2147483648
        %v598 = vsel %vm596, %v597, %v595
        %v599 = vrsqrt.pop %v465
        %v600 = vmul.f32 %v465, %v599
        %vm601 = vcmp.eq.f32.partialorder %v465, inf
        %v602 = vsel %vm601, %v465, %v600
        %vm603 = vcmp.eq.f32.partialorder %v465, 0.0
        %v604 = vand.u32 %v465, 2147483648
        %v605 = vsel %vm603, %v604, %v602
        %v606 = vrsqrt.pop %v466
        %v607 = vmul.f32 %v466, %v606
        %vm608 = vcmp.eq.f32.partialorder %v466, inf
        %v609 = vsel %vm608, %v466, %v607
        %vm610 = vcmp.eq.f32.partialorder %v466, 0.0
        %v611 = vand.u32 %v466, 2147483648
        %v612 = vsel %vm610, %v611, %v609
        %v613 = vrsqrt.pop %v467
        %v614 = vmul.f32 %v467, %v613
        %vm615 = vcmp.eq.f32.partialorder %v467, inf
        %v616 = vsel %vm615, %v467, %v614
        %vm617 = vcmp.eq.f32.partialorder %v467, 0.0
        %v618 = vand.u32 %v467, 2147483648
        %v619 = vsel %vm617, %v618, %v616
        %v620 = vrsqrt.pop %v468
        %v621 = vmul.f32 %v468, %v620
        %vm622 = vcmp.eq.f32.partialorder %v468, inf
        %v623 = vsel %vm622, %v468, %v621
        %vm624 = vcmp.eq.f32.partialorder %v468, 0.0
        %v625 = vand.u32 %v468, 2147483648
        %v626 = vsel %vm624, %v625, %v623
        %v627 = vrsqrt.pop %v469
        %v628 = vmul.f32 %v469, %v627
        %vm629 = vcmp.eq.f32.partialorder %v469, inf
        %v630 = vsel %vm629, %v469, %v628
        %vm631 = vcmp.eq.f32.partialorder %v469, 0.0
        %v632 = vand.u32 %v469, 2147483648
        %v633 = vsel %vm631, %v632, %v630
        %v634 = vrsqrt.pop %v470
        %v635 = vmul.f32 %v470, %v634
        %vm636 = vcmp.eq.f32.partialorder %v470, inf
        %v637 = vsel %vm636, %v470, %v635
        %vm638 = vcmp.eq.f32.partialorder %v470, 0.0
        %v639 = vand.u32 %v470, 2147483648
        %v640 = vsel %vm638, %v639, %v637
        %v641 = vrsqrt.pop %v471
        %v642 = vmul.f32 %v471, %v641
        %vm643 = vcmp.eq.f32.partialorder %v471, inf
        %v644 = vsel %vm643, %v471, %v642
        %vm645 = vcmp.eq.f32.partialorder %v471, 0.0
        %v646 = vand.u32 %v471, 2147483648
        %v647 = vsel %vm645, %v646, %v644
        %v648 = vrsqrt.pop %v472
        %v649 = vmul.f32 %v472, %v648
        %vm650 = vcmp.eq.f32.partialorder %v472, inf
        %v651 = vsel %vm650, %v472, %v649
        %vm652 = vcmp.eq.f32.partialorder %v472, 0.0
        %v653 = vand.u32 %v472, 2147483648
        %v654 = vsel %vm652, %v653, %v651
        %v655 = vrsqrt.pop %v473
        %v656 = vmul.f32 %v473, %v655
        %vm657 = vcmp.eq.f32.partialorder %v473, inf
        %v658 = vsel %vm657, %v473, %v656
        %vm659 = vcmp.eq.f32.partialorder %v473, 0.0
        %v660 = vand.u32 %v473, 2147483648
        %v661 = vsel %vm659, %v660, %v658
        %v662 = vrsqrt.pop %v474
        %v663 = vmul.f32 %v474, %v662
        %vm664 = vcmp.eq.f32.partialorder %v474, inf
        %v665 = vsel %vm664, %v474, %v663
        %vm666 = vcmp.eq.f32.partialorder %v474, 0.0
        %v667 = vand.u32 %v474, 2147483648
        %v668 = vsel %vm666, %v667, %v665
        %v669 = vrsqrt.pop %v475
        %v670 = vmul.f32 %v475, %v669
        %vm671 = vcmp.eq.f32.partialorder %v475, inf
        %v672 = vsel %vm671, %v475, %v670
        %vm673 = vcmp.eq.f32.partialorder %v475, 0.0
        %v674 = vand.u32 %v475, 2147483648
        %v675 = vsel %vm673, %v674, %v672
        %v676 = vrsqrt.pop %v476
        %v677 = vmul.f32 %v476, %v676
        %vm678 = vcmp.eq.f32.partialorder %v476, inf
        %v679 = vsel %vm678, %v476, %v677
        %vm680 = vcmp.eq.f32.partialorder %v476, 0.0
        %v681 = vand.u32 %v476, 2147483648
        %v682 = vsel %vm680, %v681, %v679
        %v683 = vrsqrt.pop %v477
        %v684 = vmul.f32 %v477, %v683
        %vm685 = vcmp.eq.f32.partialorder %v477, inf
        %v686 = vsel %vm685, %v477, %v684
        %vm687 = vcmp.eq.f32.partialorder %v477, 0.0
        %v688 = vand.u32 %v477, 2147483648
        %v689 = vsel %vm687, %v688, %v686
        %v690 = vrsqrt.pop %v478
        %v691 = vmul.f32 %v478, %v690
        %vm692 = vcmp.eq.f32.partialorder %v478, inf
        %v693 = vsel %vm692, %v478, %v691
        %vm694 = vcmp.eq.f32.partialorder %v478, 0.0
        %v695 = vand.u32 %v478, 2147483648
        %v696 = vsel %vm694, %v695, %v693
        %v697 = vrsqrt.pop %v479
        %v698 = vmul.f32 %v479, %v697
        %vm699 = vcmp.eq.f32.partialorder %v479, inf
        %v700 = vsel %vm699, %v479, %v698
        %vm701 = vcmp.eq.f32.partialorder %v479, 0.0
        %v702 = vand.u32 %v479, 2147483648
        %v703 = vsel %vm701, %v702, %v700
        %v704 = vadd.f32 %v486, 1e-06
        %v705 = vadd.f32 %v493, 1e-06
        %v706 = vadd.f32 %v500, 1e-06
        %v707 = vadd.f32 %v507, 1e-06
        %v708 = vadd.f32 %v514, 1e-06
        %v709 = vadd.f32 %v521, 1e-06
        %v710 = vadd.f32 %v528, 1e-06
        %v711 = vadd.f32 %v535, 1e-06
        %v712 = vadd.f32 %v542, 1e-06
        %v713 = vadd.f32 %v549, 1e-06
        %v714 = vadd.f32 %v556, 1e-06
        %v715 = vadd.f32 %v563, 1e-06
        %v716 = vadd.f32 %v570, 1e-06
        %v717 = vadd.f32 %v577, 1e-06
        %v718 = vadd.f32 %v584, 1e-06
        %v719 = vadd.f32 %v591, 1e-06
        %v720 = vadd.f32 %v598, 1e-06
        %v721 = vadd.f32 %v605, 1e-06
        %v722 = vadd.f32 %v612, 1e-06
        %v723 = vadd.f32 %v619, 1e-06
        %v724 = vadd.f32 %v626, 1e-06
        %v725 = vadd.f32 %v633, 1e-06
        %v726 = vadd.f32 %v640, 1e-06
        %v727 = vadd.f32 %v647, 1e-06
        %v728 = vadd.f32 %v654, 1e-06
        %v729 = vadd.f32 %v661, 1e-06
        %v730 = vadd.f32 %v668, 1e-06
        %v731 = vadd.f32 %v675, 1e-06
        %v732 = vadd.f32 %v682, 1e-06
        %v733 = vadd.f32 %v689, 1e-06
        %v734 = vadd.f32 %v696, 1e-06
        %v735 = vadd.f32 %v703, 1e-06
        %v736 = vrcp.pop %v704
        %v737 = vrcp.pop %v705
        %v738 = vrcp.pop %v706
        %v739 = vrcp.pop %v707
        %v740 = vrcp.pop %v708
        %v741 = vrcp.pop %v709
        %v742 = vrcp.pop %v710
        %v743 = vrcp.pop %v711
        %v744 = vrcp.pop %v712
        %v745 = vrcp.pop %v713
        %v746 = vrcp.pop %v714
        %v747 = vrcp.pop %v715
        %v748 = vrcp.pop %v716
        %v749 = vrcp.pop %v717
        %v750 = vrcp.pop %v718
        %v751 = vrcp.pop %v719
        %v752 = vrcp.pop %v720
        %v753 = vrcp.pop %v721
        %v754 = vrcp.pop %v722
        %v755 = vrcp.pop %v723
        %v756 = vrcp.pop %v724
        %v757 = vrcp.pop %v725
        %v758 = vrcp.pop %v726
        %v759 = vrcp.pop %v727
        %v760 = vrcp.pop %v728
        %v761 = vrcp.pop %v729
        %v762 = vrcp.pop %v730
        %v763 = vrcp.pop %v731
        %v764 = vrcp.pop %v732
        %v765 = vrcp.pop %v733
        %v766 = vrcp.pop %v734
        %v767 = vrcp.pop %v735
        %v768 = vld [vmem:[%s1] sm:$0x1]
        %v769 = vmul.f32 %v320, %v736
        %v770 = vmul.f32 %v321, %v737
        %v771 = vmul.f32 %v322, %v738
        %v772 = vmul.f32 %v323, %v739
        %v773 = vmul.f32 %v324, %v740
        %v774 = vmul.f32 %v325, %v741
        %v775 = vmul.f32 %v326, %v742
        %v776 = vmul.f32 %v327, %v743
        %v777 = vmul.f32 %v328, %v744
        %v778 = vmul.f32 %v329, %v745
        %v779 = vmul.f32 %v330, %v746
        %v780 = vmul.f32 %v331, %v747
        %v781 = vmul.f32 %v332, %v748
        %v782 = vmul.f32 %v333, %v749
        %v783 = vmul.f32 %v334, %v750
        %v784 = vmul.f32 %v335, %v751
        %v785 = vmul.f32 %v336, %v752
        %v786 = vmul.f32 %v337, %v753
        %v787 = vmul.f32 %v338, %v754
        %v788 = vmul.f32 %v339, %v755
        %v789 = vmul.f32 %v340, %v756
        %v790 = vmul.f32 %v341, %v757
        %v791 = vmul.f32 %v342, %v758
        %v792 = vmul.f32 %v343, %v759
        %v793 = vmul.f32 %v344, %v760
        %v794 = vmul.f32 %v345, %v761
        %v795 = vmul.f32 %v346, %v762
        %v796 = vmul.f32 %v347, %v763
        %v797 = vmul.f32 %v348, %v764
        %v798 = vmul.f32 %v349, %v765
        %v799 = vmul.f32 %v350, %v766
        %v800 = vmul.f32 %v351, %v767
        %v802 = vlaneseq
        %v803 = vshrl.u32 %v802, 7
        %v804 = vsub.s32 0, %v803
        %v805 = vrot.slane %v768, %v804
        %v807 = vmul.f32 %v805, %v769
        %v808 = vmul.f32 %v805, %v770
        %v809 = vmul.f32 %v805, %v771
        %v810 = vmul.f32 %v805, %v772
        %v811 = vmul.f32 %v805, %v773
        %v812 = vmul.f32 %v805, %v774
        %v813 = vmul.f32 %v805, %v775
        %v814 = vmul.f32 %v805, %v776
        %v815 = vmul.f32 %v805, %v777
        %v816 = vmul.f32 %v805, %v778
        %v817 = vmul.f32 %v805, %v779
        %v818 = vmul.f32 %v805, %v780
        %v819 = vmul.f32 %v805, %v781
        %v820 = vmul.f32 %v805, %v782
        %v821 = vmul.f32 %v805, %v783
        %v822 = vmul.f32 %v805, %v784
        %v823 = vmul.f32 %v805, %v785
        %v824 = vmul.f32 %v805, %v786
        %v825 = vmul.f32 %v805, %v787
        %v826 = vmul.f32 %v805, %v788
        %v827 = vmul.f32 %v805, %v789
        %v828 = vmul.f32 %v805, %v790
        %v829 = vmul.f32 %v805, %v791
        %v830 = vmul.f32 %v805, %v792
        %v831 = vmul.f32 %v805, %v793
        %v832 = vmul.f32 %v805, %v794
        %v833 = vmul.f32 %v805, %v795
        %v834 = vmul.f32 %v805, %v796
        %v835 = vmul.f32 %v805, %v797
        %v836 = vmul.f32 %v805, %v798
        %v837 = vmul.f32 %v805, %v799
        %v838 = vmul.f32 %v805, %v800
        %v839 = vld [vmem:[%s2] sm:$0x1]
        %v841 = vlaneseq
        %v842 = vshrl.u32 %v841, 7
        %v843 = vsub.s32 0, %v842
        %v844 = vrot.slane %v839, %v843
        %v846 = vadd.f32 %v807, %v844
        %v847 = vadd.f32 %v808, %v844
        %v848 = vadd.f32 %v809, %v844
        %v849 = vadd.f32 %v810, %v844
        %v850 = vadd.f32 %v811, %v844
        %v851 = vadd.f32 %v812, %v844
        %v852 = vadd.f32 %v813, %v844
        %v853 = vadd.f32 %v814, %v844
        %v854 = vadd.f32 %v815, %v844
        %v855 = vadd.f32 %v816, %v844
        %v856 = vadd.f32 %v817, %v844
        %v857 = vadd.f32 %v818, %v844
        %v858 = vadd.f32 %v819, %v844
        %v859 = vadd.f32 %v820, %v844
        %v860 = vadd.f32 %v821, %v844
        %v861 = vadd.f32 %v822, %v844
        %v862 = vadd.f32 %v823, %v844
        %v863 = vadd.f32 %v824, %v844
        %v864 = vadd.f32 %v825, %v844
        %v865 = vadd.f32 %v826, %v844
        %v866 = vadd.f32 %v827, %v844
        %v867 = vadd.f32 %v828, %v844
        %v868 = vadd.f32 %v829, %v844
        %v869 = vadd.f32 %v830, %v844
        %v870 = vadd.f32 %v831, %v844
        %v871 = vadd.f32 %v832, %v844
        %v872 = vadd.f32 %v833, %v844
        %v873 = vadd.f32 %v834, %v844
        %v874 = vadd.f32 %v835, %v844
        %v875 = vadd.f32 %v836, %v844
        %v876 = vadd.f32 %v837, %v844
        %v877 = vadd.f32 %v838, %v844
        %878 = vst [vmem:[%s188] sm:$0xff] %v846
        %879 = vst [vmem:[%s188 + $0x8] sm:$0xff] %v847
        %880 = vst [vmem:[%s188 + $0x10] sm:$0xff] %v848
        %881 = vst [vmem:[%s188 + $0x18] sm:$0xff] %v849
        %882 = vst [vmem:[%s188 + $0x20] sm:$0xff] %v850
        %883 = vst [vmem:[%s188 + $0x28] sm:$0xff] %v851
        %884 = vst [vmem:[%s188 + $0x30] sm:$0xff] %v852
        %885 = vst [vmem:[%s188 + $0x38] sm:$0xff] %v853
        %886 = vst [vmem:[%s188 + $0x40] sm:$0xff] %v854
        %887 = vst [vmem:[%s188 + $0x48] sm:$0xff] %v855
        %888 = vst [vmem:[%s188 + $0x50] sm:$0xff] %v856
        %889 = vst [vmem:[%s188 + $0x58] sm:$0xff] %v857
        %890 = vst [vmem:[%s188 + $0x60] sm:$0xff] %v858
        %891 = vst [vmem:[%s188 + $0x68] sm:$0xff] %v859
        %892 = vst [vmem:[%s188 + $0x70] sm:$0xff] %v860
        %893 = vst [vmem:[%s188 + $0x78] sm:$0xff] %v861
        %894 = vst [vmem:[%s188 + $0x80] sm:$0xff] %v862
        %895 = vst [vmem:[%s188 + $0x88] sm:$0xff] %v863
        %896 = vst [vmem:[%s188 + $0x90] sm:$0xff] %v864
        %897 = vst [vmem:[%s188 + $0x98] sm:$0xff] %v865
        %898 = vst [vmem:[%s188 + $0xa0] sm:$0xff] %v866
        %899 = vst [vmem:[%s188 + $0xa8] sm:$0xff] %v867
        %900 = vst [vmem:[%s188 + $0xb0] sm:$0xff] %v868
        %901 = vst [vmem:[%s188 + $0xb8] sm:$0xff] %v869
        %902 = vst [vmem:[%s188 + $0xc0] sm:$0xff] %v870
        %903 = vst [vmem:[%s188 + $0xc8] sm:$0xff] %v871
        %904 = vst [vmem:[%s188 + $0xd0] sm:$0xff] %v872
        %905 = vst [vmem:[%s188 + $0xd8] sm:$0xff] %v873
        %906 = vst [vmem:[%s188 + $0xe0] sm:$0xff] %v874
        %907 = vst [vmem:[%s188 + $0xe8] sm:$0xff] %v875
        %908 = vst [vmem:[%s188 + $0xf0] sm:$0xff] %v876
        %909 = vst [vmem:[%s188 + $0xf8] sm:$0xff] %v877
        %s910 = sand.u32 %s96, 1
        %s911 = scalar_lea.sflag [#allocation4], %s910
        %s912 = sand.u32 %s96, 1
        %s913 = smul.addr %s912, 256
        %s914 = scalar_lea.vmem [#allocation5], %s913
        // Predicated region
        $region37: #{layernorm_pallas.1} parent=31 // pred_check
          %p915 = pneg %p106
        $region38: #{layernorm_pallas.1} parent=31 // pred_check_branch
          %917 = sbr.rel (%p915) target = $region40
        $region39: #{layernorm_pallas.1} parent=31 // pred_region
          %s918 = smul.u32 32, %s20
          %s920 = ssub.s32 4096, 4096
          %921 = vsyncadd %s911, %s920
          %s922 = smul.addr %s918, 128
          %s923 = scalar_lea.hbm %s3, %s922
          %s924 = sshll.u32 %s914, 4
          %s925 = int_to_ptr.vmem [resolvable:$true] %s924
          %930 = dma.vmem_to_hbm [thread:$0]  %s925, 4096, %s923, %s911, 128, 128, 8
        $region40: #{layernorm_pallas.1} parent=31 // pred_fallthru
          _
      $region32: #{layernorm_pallas.1} parent=5 // pred_fallthru
        _
      %p931 = scmp.le.s32.totalorder 2, %s15
      // Predicated region
      $region41: #{layernorm_pallas.1} parent=5 // pred_check
        %p932 = pneg %p931
      $region42: #{layernorm_pallas.1} parent=5 // pred_check_branch
        %934 = sbr.rel (%p932) target = $region44
      $region43: #{layernorm_pallas.1} parent=5 // pred_region
        %s935 = ssub.s32 %s15, 2
        // Predicated region
        $region45: #{layernorm_pallas.1} parent=43 // pred_check
          %p936 = pneg %p112
        $region46: #{layernorm_pallas.1} parent=43 // pred_check_branch
          %938 = sbr.rel (%p936) target = $region48
        $region47: #{layernorm_pallas.1} parent=43 // pred_region
          %s939 = sand.u32 %s97, 1
          %s940 = scalar_lea.sflag [#allocation4], %s939
          %s941 = sand.u32 %s97, 1
          %s942 = smul.addr %s941, 256
          %s943 = scalar_lea.vmem [#allocation5], %s942
          %944 = dma.done %s940, 4096
        $region48: #{layernorm_pallas.1} parent=43 // pred_fallthru
          _
      $region44: #{layernorm_pallas.1} parent=5 // pred_fallthru
        _
    $region6: #{layernorm_pallas.1} parent=1 // loop_footer
      %s19 = sadd.s32 1, %s15
    $region7: #{layernorm_pallas.1} parent=1 // loop_footer_branch
      %14 = sbr.rel target = $region3
    $region8: #{layernorm_pallas.1} parent=1 // loop_exit
      _
    %945 = vsyncpa [#allocation3], 1
    %s946 = scalar_lea.sflag [#allocation3], 1
    %947 = vsyncpa %s946, 1
    %948 = vsyncpa [#allocation4], 1
    %s949 = scalar_lea.sflag [#allocation4], 1
    %950 = vsyncpa %s949, 1

</llo_original>
